<compile_context>
chip_gen: v5e
topology: v5e:2x2
jax: 0.10.0
libtpu: 0.0.40
codegen_flags: <defaults>
</compile_context>

<pallas_src>
import functools
import math

import jax
import jax.numpy as jnp
from jax import lax
from jax.experimental import pallas as pl
from jax.experimental.pallas import tpu as pltpu

LANES = 128                     # lane (last-dim) width, fixed
TM_TARGET = 8192                # block rows per grid step (4 MiB/buffer @ f32)
VMEM_LIMIT = 32 * 1024 * 1024   # raise v5e's 16 MiB scoped default; v6e/v7x default


def _round_up(n, m):
    return ((n + m - 1) // m) * m


def _act_and_loss_kernel(x_ref, y_ref, out_ref, *,
                         tm, nblocks, acc_rows, full_rows, rem, mask_last):
    j = pl.program_id(0)

    @pl.when(j == 0)
    def _():
        out_ref[...] = jnp.zeros_like(out_ref)

    def _accumulate(apply_mask):
        x = x_ref[...].astype(jnp.float32)
        # sigmoid(x) == 0.5 * tanh(0.5 * x) + 0.5  (one EUP op + cheap VPU ops)
        a = 0.5 * jnp.tanh(0.5 * x) + 0.5
        d = a - y_ref[...].astype(jnp.float32)
        sq = d * d
        if apply_mask:
            # Zero out-of-range rows/lanes of the last block (padding / partial
            # block data is undefined).  Bounds are compile-time constants.
            row = j * tm + lax.broadcasted_iota(jnp.int32, (tm, LANES), 0)
            valid = row < full_rows
            if rem:
                lane = lax.broadcasted_iota(jnp.int32, (tm, LANES), 1)
                valid = valid | ((row == full_rows) & (lane < rem))
            sq = jnp.where(valid, sq, 0.0)
        # Reduce the (tm, 128) tile into the resident (acc_rows, 128) output
        # accumulator with plain VPU vreg adds (no lane/sublane crossing).
        out_ref[...] += jnp.sum(sq.reshape(-1, acc_rows, LANES), axis=0)

    if mask_last:
        @pl.when(j == nblocks - 1)
        def _():
            _accumulate(True)

        @pl.when(j != nblocks - 1)
        def _():
            _accumulate(False)
    else:
        _accumulate(False)


def act_and_loss(x, labels):
    """Sigmoid activation + MSE loss in a single Pallas kernel.

    x, labels: arrays of identical shape (any rank, any float dtype).
    Returns: scalar float32 loss = mean((sigmoid(x) - labels)**2).
    """
    assert x.shape == labels.shape
    total = math.prod(x.shape)
    full_rows, rem = divmod(total, LANES)

    xf = x.reshape(-1)
    yf = labels.reshape(-1)
    if rem:
        # Rare fallback when total is not lane-aligned: pad the flat views up
        # to a multiple of 128.  Pad values are irrelevant (kernel masks them).
        pad = LANES - rem
        xf = jnp.pad(xf, (0, pad))
        yf = jnp.pad(yf, (0, pad))
    rows = full_rows + (1 if rem else 0)
    x2 = xf.reshape(rows, LANES)   # layout-preserving reshape, no HBM copy
    y2 = yf.reshape(rows, LANES)

    # Row alignment: 8 sublanes per 32-bit row group, scaled for packed dtypes.
    packing = 4 // max(1, min(x2.dtype.itemsize, y2.dtype.itemsize, 4))
    row_align = 8 * packing
    tm = min(TM_TARGET, _round_up(rows, row_align))
    acc_rows = 32 if tm % 32 == 0 else row_align
    nblocks = pl.cdiv(rows, tm)
    mask_last = (rows % tm != 0) or (rem != 0)

    kernel = functools.partial(
        _act_and_loss_kernel, tm=tm, nblocks=nblocks, acc_rows=acc_rows,
        full_rows=full_rows, rem=rem, mask_last=mask_last)

    partial_sums = pl.pallas_call(
        kernel,
        out_shape=jax.ShapeDtypeStruct((acc_rows, LANES), jnp.float32),
        grid=(nblocks,),
        in_specs=[
            pl.BlockSpec((tm, LANES), lambda j: (j, 0)),
            pl.BlockSpec((tm, LANES), lambda j: (j, 0)),
        ],
        out_specs=pl.BlockSpec((acc_rows, LANES), lambda j: (0, 0)),
        compiler_params=pltpu.CompilerParams(
            dimension_semantics=("arbitrary",),
            vmem_limit_bytes=VMEM_LIMIT),
        cost_estimate=pl.CostEstimate(
            flops=8 * total,
            transcendentals=total,
            bytes_accessed=total * (x.dtype.itemsize + labels.dtype.itemsize)
                            + acc_rows * LANES * 4),
    )(x2, y2)

    return jnp.sum(partial_sums) * (1.0 / float(total))


def _reference(x, labels):
    a = jax.nn.sigmoid(x.astype(jnp.float32))
    d = a - labels.astype(jnp.float32)
    return jnp.mean(d * d)


if __name__ == "__main__":
    key = jax.random.PRNGKey(0)
    kx, ky = jax.random.split(key)
    B, C, H, W = 2, 4, 16, 16
    x = jax.random.normal(kx, (B, C, H, W), dtype=jnp.float32)
    labels = jax.random.uniform(ky, (B, C, H, W), dtype=jnp.float32)

    loss = jax.jit(act_and_loss)(x, labels)
    jax.block_until_ready(loss)

    ref = _reference(x, labels)
    assert jnp.allclose(loss, ref, rtol=1e-5, atol=1e-5), (loss, ref)
    print("KERNEL_OK")
</pallas_src>

<mosaic_0001>
module attributes {stable_mosaic.version = 11 : i64} {
  func.func @_act_and_loss_kernel(%arg0: i32, %arg1: memref<16x128xf32, #tpu.memory_space<vmem>>, %arg2: memref<16x128xf32, #tpu.memory_space<vmem>>, %arg3: memref<8x128xf32, #tpu.memory_space<vmem>>) attributes {dimension_semantics = [#tpu.dimension_semantics<arbitrary>], iteration_bounds = array<i64: 1>, scalar_prefetch = 0 : i64, scratch_operands = 0 : i64, tpu.core_type = #tpu.core_type<tc>, window_params = [{transform_indices = @transform_0, window_bounds = array<i64: 16, 128>}, {transform_indices = @transform_1, window_bounds = array<i64: 16, 128>}, {pipeline_mode = #tpu.pipeline_mode<synchronous>, transform_indices = @transform_2, window_bounds = array<i64: 8, 128>}]} {
    %c0_i32 = arith.constant 0 : i32
    %0 = arith.cmpi eq, %arg0, %c0_i32 : i32
    %1 = arith.extui %0 : i1 to i32
    %c0_i32_0 = arith.constant 0 : i32
    %2 = arith.cmpi ne, %1, %c0_i32_0 : i32
    scf.if %2 {
      %cst_11 = arith.constant 0.000000e+00 : f32
      %19 = vector.broadcast %cst_11 : f32 to vector<8x128xf32>
      %c0_12 = arith.constant 0 : index
      %c0_13 = arith.constant 0 : index
      %20 = vector.load %arg3[%c0_12, %c0_13] : memref<8x128xf32, #tpu.memory_space<vmem>>, vector<8x128xf32>
      tpu.vector_store %arg3[%c0_12, %c0_13], %19 {strides = array<i32>} : memref<8x128xf32, #tpu.memory_space<vmem>>, vector<8x128xf32>,
    } else {
    }
    %c0 = arith.constant 0 : index
    %c0_1 = arith.constant 0 : index
    %3 = vector.load %arg1[%c0, %c0_1] : memref<16x128xf32, #tpu.memory_space<vmem>>, vector<16x128xf32>
    %cst = arith.constant 5.000000e-01 : f32
    %4 = vector.broadcast %cst : f32 to vector<16x128xf32>
    %5 = arith.mulf %4, %3 : vector<16x128xf32>
    %6 = math.tanh %5 : vector<16x128xf32>
    %cst_2 = arith.constant 5.000000e-01 : f32
    %7 = vector.broadcast %cst_2 : f32 to vector<16x128xf32>
    %8 = arith.mulf %7, %6 : vector<16x128xf32>
    %cst_3 = arith.constant 5.000000e-01 : f32
    %9 = vector.broadcast %cst_3 : f32 to vector<16x128xf32>
    %10 = arith.addf %8, %9 : vector<16x128xf32>
    %c0_4 = arith.constant 0 : index
    %c0_5 = arith.constant 0 : index
    %11 = vector.load %arg2[%c0_4, %c0_5] : memref<16x128xf32, #tpu.memory_space<vmem>>, vector<16x128xf32>
    %12 = arith.subf %10, %11 : vector<16x128xf32>
    %13 = arith.mulf %12, %12 : vector<16x128xf32>
    %c0_6 = arith.constant 0 : index
    %c0_7 = arith.constant 0 : index
    %14 = vector.load %arg3[%c0_6, %c0_7] : memref<8x128xf32, #tpu.memory_space<vmem>>, vector<8x128xf32>
    %15 = vector.shape_cast %13 : vector<16x128xf32> to vector<2x8x128xf32>
    %cst_8 = arith.constant dense<0.000000e+00> : vector<8x128xf32>
    %16 = vector.multi_reduction <add>, %15, %cst_8 [0] : vector<2x8x128xf32> to vector<8x128xf32>
    %17 = arith.addf %14, %16 : vector<8x128xf32>
    %c0_9 = arith.constant 0 : index
    %c0_10 = arith.constant 0 : index
    %18 = vector.load %arg3[%c0_9, %c0_10] : memref<8x128xf32, #tpu.memory_space<vmem>>, vector<8x128xf32>
    tpu.vector_store %arg3[%c0_9, %c0_10], %17 {strides = array<i32>} : memref<8x128xf32, #tpu.memory_space<vmem>>, vector<8x128xf32>,
    return
  }
  func.func @transform_0(%arg0: i32) -> (i32, i32) {
    %c0_i32 = arith.constant 0 : i32
    %c0_i32_0 = arith.constant 0 : i32
    return %arg0, %c0_i32 : i32, i32
  }
  func.func @transform_1(%arg0: i32) -> (i32, i32) {
    %c0_i32 = arith.constant 0 : i32
    %c0_i32_0 = arith.constant 0 : i32
    return %arg0, %c0_i32 : i32, i32
  }
  func.func @transform_2(%arg0: i32) -> (i32, i32) {
    %c0_i32 = arith.constant 0 : i32
    %c0_i32_0 = arith.constant 0 : i32
    %c0_i32_1 = arith.constant 0 : i32
    return %c0_i32, %c0_i32_0 : i32, i32
  }
}

</mosaic_0001>

<llo_original>
// kernel: act_and_loss.1
$region0: #{act_and_loss.1}
  #allocation0 [shape = 'u32[]', space=smem, size = 0x4, offset = 0x4, fixed_abs, tag = 'smem constant byte address 0x4 - core index']
  #allocation1 [shape = 'u32[72,128]{1,0:T(1,128)}', space=vmem, size = 0x9000, scoped, tag = 'internal scratch']
  %s0 = inlined_call_operand.vmem [shape: f32[16,128], index: 0, kind: input, shape index: {}]
  %s1 = inlined_call_operand.vmem [shape: f32[16,128], index: 1, kind: input, shape index: {}]
  %s2 = inlined_call_operand.vmem [shape: f32[8,128], index: 2, kind: output, shape index: {}]
  %s3 = sld [smem:[#allocation0]]
  $region22: #{act_and_loss.1} parent=0
    _
  %s5 = ssub.s32 1, %s3
  %s6 = scalar_select 0, %s5, %s3
  // Predicated region
  $region2: #{act_and_loss.1} parent=0 // pred_check
    _
  $region3: #{act_and_loss.1} parent=0 // pred_check_branch
    %8 = sbr.rel (0) target = $region5
  $region4: #{act_and_loss.1} parent=0 // pred_region
    _
  $region5: #{act_and_loss.1} parent=0 // pred_fallthru
    _
  // Predicated region
  $region6: #{act_and_loss.1} parent=0 // pred_check
    _
  $region7: #{act_and_loss.1} parent=0 // pred_check_branch
    %10 = sbr.rel (0) target = $region9
  $region8: #{act_and_loss.1} parent=0 // pred_region
    _
  $region9: #{act_and_loss.1} parent=0 // pred_fallthru
    _
  %p11 = scmp.eq.s32.totalorder 0, 0
  // Predicated region
  $region10: #{act_and_loss.1} parent=0 // pred_check
    %p12 = pneg %p11
  $region11: #{act_and_loss.1} parent=0 // pred_check_branch
    %14 = sbr.rel (%p12) target = $region13
  $region12: #{act_and_loss.1} parent=0 // pred_region
    %15 = vst [vmem:[%s2] sm:$0xff] 0.0
  $region13: #{act_and_loss.1} parent=0 // pred_fallthru
    _
  %v16 = vld [vmem:[%s0] sm:$0xff]
  %v17 = vld [vmem:[%s0 + $0x8] sm:$0xff]
  %v18 = vmul.f32 %v16, 0.5
  %v19 = vmul.f32 %v17, 0.5
  %v20 = vtanh.pop %v18
  %v21 = vtanh.pop %v19
  %v22 = vmul.f32 %v20, 0.5
  %v23 = vmul.f32 %v21, 0.5
  %v24 = vadd.f32 %v22, 0.5
  %v25 = vadd.f32 %v23, 0.5
  %v26 = vld [vmem:[%s1] sm:$0xff]
  %v27 = vld [vmem:[%s1 + $0x8] sm:$0xff]
  %v28 = vsub.f32 %v24, %v26
  %v29 = vsub.f32 %v25, %v27
  %v30 = vmul.f32 %v28, %v28
  %v31 = vmul.f32 %v29, %v29
  %v32 = vld [vmem:[%s2] sm:$0xff]
  %v33 = vadd.f32 %v30, %v31
  %v34 = vadd.f32 %v32, %v33
  %35 = vst [vmem:[%s2] sm:$0xff] %v34
  // Predicated region
  $region14: #{act_and_loss.1} parent=0 // pred_check
    _
  $region15: #{act_and_loss.1} parent=0 // pred_check_branch
    %37 = sbr.rel (0) target = $region17
  $region16: #{act_and_loss.1} parent=0 // pred_region
    _
  $region17: #{act_and_loss.1} parent=0 // pred_fallthru
    _
  // Predicated region
  $region18: #{act_and_loss.1} parent=0 // pred_check
    _
  $region19: #{act_and_loss.1} parent=0 // pred_check_branch
    %39 = sbr.rel (0) target = $region21
  $region20: #{act_and_loss.1} parent=0 // pred_region
    _
  $region21: #{act_and_loss.1} parent=0 // pred_fallthru
    _

</llo_original>
